<compile_context>
chip_gen: v5e
topology: v5e:2x2
jax: 0.10.0
libtpu: 0.0.40
codegen_flags: <defaults>
</compile_context>

<pallas_src>
import functools

import jax
import jax.numpy as jnp
from jax.experimental import pallas as pl
from jax.experimental.pallas import tpu as pltpu


def _round_up(x: int, m: int) -> int:
    return ((x + m - 1) // m) * m


def _ce_partial_kernel(x_ref, t_ref, o_ref, *, total_n, block_rows, log_full_tile):
    """o[...] = broadcast( sum_r  -clamp(log(x[r, t[r]]), -100) ) over valid rows."""
    i = pl.program_id(0)

    x = x_ref[...]                                   # (block_rows, C) f32 probabilities
    t = t_ref[...]                                   # (block_rows, 1)  i32 targets

    col = jax.lax.broadcasted_iota(jnp.int32, x.shape, dimension=1)
    onehot = col == t                                # (block_rows, C) bool

    if log_full_tile:
        # Small C (<= 128): log the full tile (same EUP vreg count as logging a
        # lane-padded column), clamp, then select the target column.  This is
        # literally the module's op order: log -> clamp -> gather.
        logp = jnp.maximum(jnp.log(x), jnp.float32(-100.0))
        picked = jnp.sum(jnp.where(onehot, logp, jnp.float32(0.0)),
                         axis=-1, keepdims=True)     # (block_rows, 1)
    else:
        # Large C: gather the target probability first so only one log per row
        # hits the EUP (block_rows/8 vregs instead of block_rows*C/1024).
        p_t = jnp.sum(jnp.where(onehot, x, jnp.float32(0.0)),
                      axis=-1, keepdims=True)        # (block_rows, 1)
        picked = jnp.maximum(jnp.log(p_t), jnp.float32(-100.0))

    # Mask rows past N (ragged final block): they contribute 0 to the partial
    # sum and any NaN/garbage in the unselected branch is discarded.
    row = jax.lax.broadcasted_iota(jnp.int32, picked.shape, dimension=0) + i * block_rows
    contrib = jnp.where(row < total_n, -picked, jnp.float32(0.0))   # (block_rows, 1)

    partial = jnp.sum(contrib, axis=0, keepdims=True)               # (1, 1)
    o_ref[...] = jnp.broadcast_to(partial, o_ref.shape)             # (8, 128) dense


def ce_loss(probs: jax.Array, target: jax.Array, *,
            max_block_rows: int = 2048,
            vmem_tile_budget_bytes: int = 12 << 20) -> jax.Array:
    """Cross-entropy loss matching the PyTorch CELoss module.

    probs:  [N, C] float32 probabilities (what the module expects)
    target: [N] int class indices
    returns scalar float32
    """
    n, c = probs.shape
    probs = probs.astype(jnp.float32)
    t2d = target.astype(jnp.int32).reshape(n, 1)

    # Per-row VMEM bytes per pipeline buffer: f32 probability row (4*c) plus the
    # lane-padded int32 target row (4*128).  Double-buffered by BlockSpec.
    bytes_per_row = 4 * c + 4 * 128
    rows_fit = max(8, vmem_tile_budget_bytes // (2 * bytes_per_row))
    block_rows = min(max_block_rows, rows_fit, _round_up(n, 8))
    block_rows = max(8, (block_rows // 8) * 8)

    num_blocks = pl.cdiv(n, block_rows)

    # TODO(synk): NLLLoss ignore_index=-100 / per-class weights not implemented
    #             (PyTorch defaults, valid in-range targets assumed).
    partials = pl.pallas_call(
        functools.partial(_ce_partial_kernel,
                          total_n=n,
                          block_rows=block_rows,
                          log_full_tile=(c <= 128)),
        out_shape=jax.ShapeDtypeStruct((num_blocks * 8, 128), jnp.float32),
        grid_spec=pltpu.PrefetchScalarGridSpec(
            num_scalar_prefetch=0,
            grid=(num_blocks,),
            in_specs=[
                pl.BlockSpec((block_rows, c), lambda i: (i, 0)),
                pl.BlockSpec((block_rows, 1), lambda i: (i, 0)),
            ],
            out_specs=pl.BlockSpec((8, 128), lambda i: (i, 0)),
        ),
        compiler_params=pltpu.CompilerParams(
            dimension_semantics=("parallel",),
            vmem_limit_bytes=32 * 1024 * 1024,
        ),
    )(probs, t2d)

    # One partial per grid block lives at rows 0, 8, 16, ... (broadcast-filled).
    return jnp.sum(partials[::8, 0]) / jnp.float32(n)


def _ce_loss_ref(probs, target):
    logp = jnp.maximum(jnp.log(probs), -100.0)
    picked = jnp.take_along_axis(logp, target.reshape(-1, 1).astype(jnp.int32), axis=1)
    return -jnp.mean(picked)


if __name__ == "__main__":
    key = jax.random.PRNGKey(0)
    k1, k2 = jax.random.split(key)

    N, C = 16, 32
    logits = jax.random.normal(k1, (N, C), dtype=jnp.float32)
    probs = jax.nn.softmax(logits, axis=-1)                 # module expects probabilities
    target = jax.random.randint(k2, (N,), 0, C, dtype=jnp.int32)

    loss = ce_loss(probs, target)
    jax.block_until_ready(loss)

    ref = _ce_loss_ref(probs, target)
    assert jnp.allclose(loss, ref, atol=1e-5, rtol=1e-5), (loss, ref)

    print("KERNEL_OK")
</pallas_src>

<mosaic_0001>
module attributes {stable_mosaic.version = 11 : i64} {
  func.func @_ce_partial_kernel(%arg0: i32, %arg1: memref<16x32xf32, #tpu.memory_space<vmem>>, %arg2: memref<16x1xi32, #tpu.memory_space<vmem>>, %arg3: memref<8x128xf32, #tpu.memory_space<vmem>>) attributes {dimension_semantics = [#tpu.dimension_semantics<parallel>], iteration_bounds = array<i64: 1>, scalar_prefetch = 0 : i64, scratch_operands = 0 : i64, tpu.core_type = #tpu.core_type<tc>, window_params = [{transform_indices = @transform_0, window_bounds = array<i64: 16, 32>}, {transform_indices = @transform_1, window_bounds = array<i64: 16, 1>}, {transform_indices = @transform_2, window_bounds = array<i64: 8, 128>}]} {
    %c0 = arith.constant 0 : index
    %c0_0 = arith.constant 0 : index
    %0 = vector.load %arg1[%c0, %c0_0] : memref<16x32xf32, #tpu.memory_space<vmem>>, vector<16x32xf32>
    %c0_1 = arith.constant 0 : index
    %c0_2 = arith.constant 0 : index
    %1 = vector.load %arg2[%c0_1, %c0_2] : memref<16x1xi32, #tpu.memory_space<vmem>>, vector<16x1xi32>
    %2 = tpu.iota {dimensions = array<i32: 1>} : vector<16x32xi32>
    %3 = vector.broadcast %1 : vector<16x1xi32> to vector<16x32xi32>
    %4 = arith.cmpi eq, %2, %3 : vector<16x32xi32>
    %5 = math.log %0 : vector<16x32xf32>
    %cst = arith.constant -1.000000e+02 : f32
    %6 = vector.broadcast %cst : f32 to vector<16x32xf32>
    %7 = arith.maximumf %5, %6 : vector<16x32xf32>
    %cst_3 = arith.constant 0.000000e+00 : f32
    %8 = vector.broadcast %cst_3 : f32 to vector<16x32xf32>
    %9 = arith.select %4, %7, %8 : vector<16x32xi1>, vector<16x32xf32>
    %cst_4 = arith.constant dense<0.000000e+00> : vector<16xf32>
    %10 = vector.multi_reduction <add>, %9, %cst_4 [1] : vector<16x32xf32> to vector<16xf32>
    %11 = vector.shape_cast %10 : vector<16xf32> to vector<16x1xf32>
    %12 = tpu.iota {dimensions = array<i32: 0>} : vector<16x1xi32>
    %c16_i32 = arith.constant 16 : i32
    %13 = arith.muli %arg0, %c16_i32 : i32
    %14 = vector.broadcast %13 : i32 to vector<16x1xi32>
    %15 = arith.addi %12, %14 : vector<16x1xi32>
    %c16_i32_5 = arith.constant 16 : i32
    %16 = vector.broadcast %c16_i32_5 : i32 to vector<16x1xi32>
    %17 = arith.cmpi slt, %15, %16 : vector<16x1xi32>
    %cst_6 = arith.constant 0.000000e+00 : f32
    %18 = vector.broadcast %cst_6 : f32 to vector<16x1xf32>
    %19 = arith.subf %18, %11 : vector<16x1xf32>
    %cst_7 = arith.constant 0.000000e+00 : f32
    %20 = vector.broadcast %cst_7 : f32 to vector<16x1xf32>
    %21 = arith.select %17, %19, %20 : vector<16x1xi1>, vector<16x1xf32>
    %cst_8 = arith.constant dense<0.000000e+00> : vector<1xf32>
    %22 = vector.multi_reduction <add>, %21, %cst_8 [0] : vector<16x1xf32> to vector<1xf32>
    %23 = vector.shape_cast %22 : vector<1xf32> to vector<1x1xf32>
    %24 = vector.shape_cast %23 : vector<1x1xf32> to vector<1x1xf32>
    %25 = vector.broadcast %24 : vector<1x1xf32> to vector<8x128xf32>
    %c0_9 = arith.constant 0 : index
    %c0_10 = arith.constant 0 : index
    %26 = vector.load %arg3[%c0_9, %c0_10] : memref<8x128xf32, #tpu.memory_space<vmem>>, vector<8x128xf32>
    tpu.vector_store %arg3[%c0_9, %c0_10], %25 {strides = array<i32>} : memref<8x128xf32, #tpu.memory_space<vmem>>, vector<8x128xf32>,
    return
  }
  func.func @transform_0(%arg0: i32) -> (i32, i32) {
    %c0_i32 = arith.constant 0 : i32
    %c0_i32_0 = arith.constant 0 : i32
    return %arg0, %c0_i32 : i32, i32
  }
  func.func @transform_1(%arg0: i32) -> (i32, i32) {
    %c0_i32 = arith.constant 0 : i32
    %c0_i32_0 = arith.constant 0 : i32
    return %arg0, %c0_i32 : i32, i32
  }
  func.func @transform_2(%arg0: i32) -> (i32, i32) {
    %c0_i32 = arith.constant 0 : i32
    %c0_i32_0 = arith.constant 0 : i32
    return %arg0, %c0_i32 : i32, i32
  }
}

</mosaic_0001>

<llo_original>
// kernel: tpu_custom_call.1
$region0: #{tpu_custom_call.1}
  #allocation0 [shape = 'u32[]', space=smem, size = 0x4, offset = 0x4, fixed_abs, tag = 'smem constant byte address 0x4 - core index']
  #allocation1 [shape = 'u32[72,128]{1,0:T(1,128)}', space=vmem, size = 0x9000, scoped, tag = 'internal scratch']
  %s0 = inlined_call_operand.vmem [shape: f32[16,32], index: 0, kind: input, shape index: {}]
  %s1 = inlined_call_operand.vmem [shape: s32[16,1], index: 1, kind: input, shape index: {}]
  %s2 = inlined_call_operand.hbm [shape: f32[8,128], index: 2, kind: output, shape index: {}]
  %s3 = sld [smem:[#allocation0]]
  $region18: #{tpu_custom_call.1} parent=0
    _
  %s5 = ssub.s32 1, %s3
  %s6 = scalar_select 0, %s5, %s3
  $region1: #{tpu_custom_call.1} parent=0
    #allocation2 [shape = 'u8[4096]{0}', space=vmem, size = 0x1000, scoped, tag = 'output window, operand 0, single buffered']
    #allocation3 [shape = 's32[1]{0}', space=sflag, size = 0x4, scoped, tag = 'scoped memory for tpu_custom_call.1']
    %7 = vsyncpa [#allocation3], 0
    // Predicated region
    $region2: #{tpu_custom_call.1} parent=1 // pred_check
      _
    $region3: #{tpu_custom_call.1} parent=1 // pred_check_branch
      %9 = sbr.rel (0) target = $region5
    $region4: #{tpu_custom_call.1} parent=1 // pred_region
      _
    $region5: #{tpu_custom_call.1} parent=1 // pred_fallthru
      _
    // Predicated region
    $region6: #{tpu_custom_call.1} parent=1 // pred_check
      _
    $region7: #{tpu_custom_call.1} parent=1 // pred_check_branch
      %11 = sbr.rel (0) target = $region9
    $region8: #{tpu_custom_call.1} parent=1 // pred_region
      _
    $region9: #{tpu_custom_call.1} parent=1 // pred_fallthru
      _
    %v12 = vld [vmem:[%s0] sm:$0xff]
    %v13 = vld [vmem:[%s0 + $0x8] sm:$0xff]
    %v14 = vld [vmem:[%s1] sm:$0xff]
    %v15 = vld [vmem:[%s1 + $0x8] sm:$0xff]
    %v16 = vlaneseq
    %v17 = vand.u32 %v16, 127
    %18 = vset.pattern.permute.xlu0 0
    %19 = vperm.xlu0 %18, %v14
    %v20 = vpop.permute.xlu0 %19
    %21 = vset.pattern.permute.xlu0 0
    %22 = vperm.xlu0 %21, %v15
    %v23 = vpop.permute.xlu0 %22
    %vm24 = vcmp.eq.s32.totalorder %v17, %v20
    %vm25 = vcmp.eq.s32.totalorder %v17, %v23
    %v26 = vlog2.pop %v12
    %v27 = vmul.f32 %v26, 0.6931472
    %v28 = vlog2.pop %v13
    %v29 = vmul.f32 %v28, 0.6931472
    %v30 = vmax.f32 %v27, -100.0
    %v31 = vmax.f32 %v29, -100.0
    %v32 = vsel %vm24, %v30, 0.0
    %v33 = vsel %vm25, %v31, 0.0
    %vm34 = vcmask 261120
    %v35 = vsel %vm34, %v32, 0.0
    %36 = vadd.xlane.f32.xlu0 %v35
    %v37 = vpop.xlane.xlu0 %36
    %v38 = vsel %vm34, %v33, 0.0
    %39 = vadd.xlane.f32.xlu0 %v38
    %v40 = vpop.xlane.xlu0 %39
    %v41 = vlaneseq
    %v42 = vshrl.u32 %v41, 7
    %v43 = vadd.s32 %v42, 8
    %s44 = smul.u32 0, 16
    %v45 = vstv %s44
    %v46 = vadd.s32 %v42, %v45
    %v47 = vadd.s32 %v43, %v45
    %vm48 = vcmp.lt.s32.totalorder %v46, 16
    %vm49 = vcmp.lt.s32.totalorder %v47, 16
    %v50 = vsub.f32 0.0, %v37
    %v51 = vsub.f32 0.0, %v40
    %v52 = vsel %vm48, %v50, 0.0
    %v53 = vsel %vm49, %v51, 0.0
    %v54 = vadd.f32 %v52, %v53
    %v55 = vrot.slane %v54, 4
    %v56 = vadd.f32 %v54, %v55
    %v57 = vrot.slane %v56, 2
    %v58 = vadd.f32 %v56, %v57
    %v59 = vrot.slane %v58, 1
    %v60 = vadd.f32 %v58, %v59
    %61 = vst [vmem:[#allocation2] sm:$0xff] %v60
    // Predicated region
    $region10: #{tpu_custom_call.1} parent=1 // pred_check
      _
    $region11: #{tpu_custom_call.1} parent=1 // pred_check_branch
      %63 = sbr.rel (0) target = $region13
    $region12: #{tpu_custom_call.1} parent=1 // pred_region
      %65 = vsyncadd [#allocation3], 0
      %s67 = sshll.u32 [#allocation2], 4
      %s68 = int_to_ptr.vmem [resolvable:$true] %s67
      %s69 = sshll.u32 %s2, 4
      %s70 = int_to_ptr.hbm [resolvable:$true] %s69
      %72 = dma.vmem_to_hbm [thread:$0]  %s68, 128, %s70, [#allocation3]
    $region13: #{tpu_custom_call.1} parent=1 // pred_fallthru
      _
    // Predicated region
    $region14: #{tpu_custom_call.1} parent=1 // pred_check
      _
    $region15: #{tpu_custom_call.1} parent=1 // pred_check_branch
      %74 = sbr.rel (0) target = $region17
    $region16: #{tpu_custom_call.1} parent=1 // pred_region
      %76 = dma.done [#allocation3], 128
    $region17: #{tpu_custom_call.1} parent=1 // pred_fallthru
      _
    %77 = vsyncpa [#allocation3], 1

</llo_original>
